<compile_context>
chip_gen: v7x
topology: tpu7x:2x2x1
jax: 0.10.0
libtpu: 0.0.40
codegen_flags: <defaults>
</compile_context>

<pallas_src>
import jax
import jax.numpy as jnp
from jax.experimental import pallas as pl
from jax.experimental.pallas import tpu as pltpu

IN_DIM = 768
HID_DIM = 384
OUT_DIM = 2
OUT_PAD = 128   # W2 / b2 padded to a full lane width for the MXU
MAX_TILE = 2048  # rows per grid step (f32 x tile = 6 MiB; 2x-buffered ~12 MiB VMEM)


def _mlp_kernel(x_ref, w1_ref, b1_ref, w2_ref, b2_ref, o_ref):
    # Cast MXU operands to bf16 in-kernel; accumulate in f32.
    x = x_ref[...].astype(jnp.bfloat16)
    h = jnp.dot(x, w1_ref[...], preferred_element_type=jnp.float32)
    # f32 epilogue (bias + ReLU) — safe on v5e's VPU.
    h = jnp.maximum(h + b1_ref[...], 0.0)
    o = jnp.dot(h.astype(jnp.bfloat16), w2_ref[...],
                preferred_element_type=jnp.float32)
    o = o + b2_ref[...]
    # Store only the 2 real output columns (narrow, row-major contiguous block).
    o_ref[...] = o[:, :OUT_DIM].astype(o_ref.dtype)


def _round_up(x, m):
    return ((x + m - 1) // m) * m


def _num_tensorcores_per_chip():
    """Best-effort detection: v7x has 2 TensorCores per chip, v5e/v6e have 1."""
    try:
        kind = jax.devices()[0].device_kind.lower()
    except Exception:
        return 1
    return 2 if ("v7" in kind or "7x" in kind) else 1


def _pick_tiling(B, two_cores):
    """Returns (batch_tile, B_pad). Tile is a multiple of 8; B_pad a multiple of tile."""
    B8 = _round_up(B, 8)
    if two_cores and B > 8:
        # Even number of grid steps so both TensorCores get equal work on the
        # "parallel" axis.
        n_steps = max(2, 2 * pl.cdiv(B8, 2 * MAX_TILE))
    else:
        # Single TensorCore: don't pay extra pipeline steps for small batches.
        n_steps = pl.cdiv(B8, MAX_TILE)
    tile = min(MAX_TILE, _round_up(pl.cdiv(B8, n_steps), 8))
    B_pad = _round_up(B8, tile)
    return tile, B_pad


def addn_discriminator_forward(x, w1, b1, w2, b2, *, batch_tile=None):
    """x: (B, 768) f32. w1: (768, 384), b1: (384,), w2: (384, 2), b2: (2,).

    Returns (B, 2) f32, matching Linear(768,384) -> ReLU -> Linear(384,2)
    (bf16 MXU operands, f32 accumulation).
    """
    B = x.shape[0]
    assert x.shape[1] == IN_DIM

    if batch_tile is None:
        batch_tile, B_pad = _pick_tiling(B, _num_tensorcores_per_chip() >= 2)
    else:
        assert batch_tile % 8 == 0, "batch_tile must be a multiple of 8"
        B_pad = _round_up(max(B, batch_tile), batch_tile)

    # Zero-pad the batch up to a tile multiple (padded rows sliced off at the end).
    if B_pad != B:
        x = jnp.pad(x, ((0, B_pad - B), (0, 0)))

    # One-time param prep: bf16 weights for the MXU, W2/b2 zero-padded to 128 lanes
    # (exact semantics preserved; extra columns never leave the kernel).
    w1_bf = w1.astype(jnp.bfloat16)
    w2_p = jnp.zeros((HID_DIM, OUT_PAD), jnp.bfloat16).at[:, :OUT_DIM].set(
        w2.astype(jnp.bfloat16))
    b1_p = b1.reshape(1, HID_DIM).astype(jnp.float32)
    b2_p = jnp.zeros((1, OUT_PAD), jnp.float32).at[:, :OUT_DIM].set(
        b2.astype(jnp.float32))

    grid = (B_pad // batch_tile,)

    flops = 2 * B_pad * IN_DIM * HID_DIM + 2 * B_pad * HID_DIM * OUT_PAD
    bytes_accessed = (
        B_pad * IN_DIM * 4            # x read (f32)
        + B_pad * OUT_DIM * 4         # output write (unpadded, f32)
        + IN_DIM * HID_DIM * 2        # W1 (bf16)
        + HID_DIM * 4                 # b1
        + HID_DIM * OUT_PAD * 2       # W2 (padded, bf16)
        + OUT_PAD * 4                 # b2 (padded)
    )
    cost = pl.CostEstimate(flops=flops, transcendentals=0,
                           bytes_accessed=bytes_accessed)

    # Resident params: constant index_maps + single buffer (no point double-buffering).
    resident = pl.Buffered(1)

    out = pl.pallas_call(
        _mlp_kernel,
        out_shape=jax.ShapeDtypeStruct((B_pad, OUT_DIM), jnp.float32),
        grid_spec=pltpu.PrefetchScalarGridSpec(
            num_scalar_prefetch=0,
            grid=grid,
            in_specs=[
                pl.BlockSpec((batch_tile, IN_DIM), lambda i: (i, 0)),  # x tile
                pl.BlockSpec((IN_DIM, HID_DIM), lambda i: (0, 0),
                             pipeline_mode=resident),                  # W1 (bf16)
                pl.BlockSpec((1, HID_DIM), lambda i: (0, 0),
                             pipeline_mode=resident),                  # b1 (f32)
                pl.BlockSpec((HID_DIM, OUT_PAD), lambda i: (0, 0),
                             pipeline_mode=resident),                  # W2 (bf16, padded)
                pl.BlockSpec((1, OUT_PAD), lambda i: (0, 0),
                             pipeline_mode=resident),                  # b2 (f32, padded)
            ],
            out_specs=pl.BlockSpec((batch_tile, OUT_DIM), lambda i: (i, 0)),
        ),
        compiler_params=pltpu.CompilerParams(
            dimension_semantics=("parallel",)),
        cost_estimate=cost,
    )(x, w1_bf, b1_p, w2_p, b2_p)

    return out[:B]


def _init_params(key):
    """Deterministic init mimicking nn.Linear default (uniform +/- 1/sqrt(fan_in))."""
    k1, k2, k3, k4 = jax.random.split(key, 4)
    bound1 = 1.0 / (IN_DIM ** 0.5)
    bound2 = 1.0 / (HID_DIM ** 0.5)
    w1 = jax.random.uniform(k1, (IN_DIM, HID_DIM), jnp.float32, -bound1, bound1)
    b1 = jax.random.uniform(k2, (HID_DIM,), jnp.float32, -bound1, bound1)
    w2 = jax.random.uniform(k3, (HID_DIM, OUT_DIM), jnp.float32, -bound2, bound2)
    b2 = jax.random.uniform(k4, (OUT_DIM,), jnp.float32, -bound2, bound2)
    return w1, b1, w2, b2


def _reference(x, w1, b1, w2, b2):
    return jnp.maximum(x @ w1 + b1, 0.0) @ w2 + b2


if __name__ == "__main__":
    key = jax.random.PRNGKey(0)
    kx, kp, kx2 = jax.random.split(key, 3)

    w1, b1, w2, b2 = _init_params(kp)

    # Small batch (exercises row padding + single/two-step grid depending on chip).
    B = 4
    x = jax.random.normal(kx, (B, IN_DIM), dtype=jnp.float32)
    out = addn_discriminator_forward(x, w1, b1, w2, b2)
    out = jax.block_until_ready(out)
    ref = _reference(x, w1, b1, w2, b2)
    assert out.shape == (B, OUT_DIM)
    # bf16 MXU operands (f32 accumulation) -> ~1e-2 relative error vs f32 reference.
    assert jnp.allclose(out, ref, atol=5e-2, rtol=5e-2), (
        float(jnp.max(jnp.abs(out - ref))))

    # Non-tile-multiple batch: exercises zero-padding + the auto-picked tiling.
    B2 = 200
    x2 = jax.random.normal(kx2, (B2, IN_DIM), dtype=jnp.float32)
    out2 = addn_discriminator_forward(x2, w1, b1, w2, b2)
    out2 = jax.block_until_ready(out2)
    ref2 = _reference(x2, w1, b1, w2, b2)
    assert out2.shape == (B2, OUT_DIM)
    assert jnp.allclose(out2, ref2, atol=5e-2, rtol=5e-2), (
        float(jnp.max(jnp.abs(out2 - ref2))))

    print("KERNEL_OK")
</pallas_src>

<mosaic_0001>
module attributes {stable_mosaic.version = 11 : i64} {
  func.func @_mlp_kernel(%arg0: i32, %arg1: memref<8x768xf32, #tpu.memory_space<vmem>>, %arg2: memref<768x384xbf16, #tpu.memory_space<vmem>>, %arg3: memref<1x384xf32, #tpu.memory_space<vmem>>, %arg4: memref<384x128xbf16, #tpu.memory_space<vmem>>, %arg5: memref<1x128xf32, #tpu.memory_space<vmem>>, %arg6: memref<8x2xf32, #tpu.memory_space<vmem>>) attributes {dimension_semantics = [#tpu.dimension_semantics<parallel>], iteration_bounds = array<i64: 1>, scalar_prefetch = 0 : i64, scratch_operands = 0 : i64, tpu.core_type = #tpu.core_type<tc>, window_params = [{transform_indices = @transform_0, window_bounds = array<i64: 8, 768>}, {pipeline_mode = #tpu.pipeline_mode<synchronous>, transform_indices = @transform_1, window_bounds = array<i64: 768, 384>}, {pipeline_mode = #tpu.pipeline_mode<synchronous>, transform_indices = @transform_2, window_bounds = array<i64: 1, 384>}, {pipeline_mode = #tpu.pipeline_mode<synchronous>, transform_indices = @transform_3, window_bounds = array<i64: 384, 128>}, {pipeline_mode = #tpu.pipeline_mode<synchronous>, transform_indices = @transform_4, window_bounds = array<i64: 1, 128>}, {transform_indices = @transform_5, window_bounds = array<i64: 8, 2>}]} {
    %c0 = arith.constant 0 : index
    %c0_0 = arith.constant 0 : index
    %0 = vector.load %arg1[%c0, %c0_0] : memref<8x768xf32, #tpu.memory_space<vmem>>, vector<8x768xf32>
    %1 = arith.truncf %0 : vector<8x768xf32> to vector<8x768xbf16>
    %c0_1 = arith.constant 0 : index
    %c0_2 = arith.constant 0 : index
    %2 = vector.load %arg2[%c0_1, %c0_2] : memref<768x384xbf16, #tpu.memory_space<vmem>>, vector<768x384xbf16>
    %cst = arith.constant dense<0.000000e+00> : vector<8x384xf32>
    %3 = tpu.matmul %1, %2, %cst {dimension_numbers = #tpu.dot_dimension_numbers<[1], [0], [0], [1], [0, 0, 1, 1], [], []>} : vector<8x768xbf16>, vector<768x384xbf16>, vector<8x384xf32> -> vector<8x384xf32>
    %c0_3 = arith.constant 0 : index
    %c0_4 = arith.constant 0 : index
    %4 = vector.load %arg3[%c0_3, %c0_4] : memref<1x384xf32, #tpu.memory_space<vmem>>, vector<1x384xf32>
    %5 = vector.broadcast %4 : vector<1x384xf32> to vector<8x384xf32>
    %6 = arith.addf %3, %5 : vector<8x384xf32>
    %cst_5 = arith.constant 0.000000e+00 : f32
    %7 = vector.broadcast %cst_5 : f32 to vector<8x384xf32>
    %8 = arith.maximumf %6, %7 : vector<8x384xf32>
    %9 = arith.truncf %8 : vector<8x384xf32> to vector<8x384xbf16>
    %c0_6 = arith.constant 0 : index
    %c0_7 = arith.constant 0 : index
    %10 = vector.load %arg4[%c0_6, %c0_7] : memref<384x128xbf16, #tpu.memory_space<vmem>>, vector<384x128xbf16>
    %cst_8 = arith.constant dense<0.000000e+00> : vector<8x128xf32>
    %11 = tpu.matmul %9, %10, %cst_8 {dimension_numbers = #tpu.dot_dimension_numbers<[1], [0], [0], [1], [0, 0, 1, 1], [], []>} : vector<8x384xbf16>, vector<384x128xbf16>, vector<8x128xf32> -> vector<8x128xf32>
    %c0_9 = arith.constant 0 : index
    %c0_10 = arith.constant 0 : index
    %12 = vector.load %arg5[%c0_9, %c0_10] : memref<1x128xf32, #tpu.memory_space<vmem>>, vector<1x128xf32>
    %13 = vector.broadcast %12 : vector<1x128xf32> to vector<8x128xf32>
    %14 = arith.addf %11, %13 : vector<8x128xf32>
    %15 = vector.extract_strided_slice %14 {offsets = [0, 0], sizes = [8, 2], strides = [1, 1]} : vector<8x128xf32> to vector<8x2xf32>
    %c0_11 = arith.constant 0 : index
    %c0_12 = arith.constant 0 : index
    %16 = vector.load %arg6[%c0_11, %c0_12] : memref<8x2xf32, #tpu.memory_space<vmem>>, vector<8x2xf32>
    tpu.vector_store %arg6[%c0_11, %c0_12], %15 {strides = array<i32>} : memref<8x2xf32, #tpu.memory_space<vmem>>, vector<8x2xf32>,
    return
  }
  func.func @transform_0(%arg0: i32) -> (i32, i32) {
    %c0_i32 = arith.constant 0 : i32
    %c0_i32_0 = arith.constant 0 : i32
    return %arg0, %c0_i32 : i32, i32
  }
  func.func @transform_1(%arg0: i32) -> (i32, i32) {
    %c0_i32 = arith.constant 0 : i32
    %c0_i32_0 = arith.constant 0 : i32
    %c0_i32_1 = arith.constant 0 : i32
    return %c0_i32, %c0_i32_0 : i32, i32
  }
  func.func @transform_2(%arg0: i32) -> (i32, i32) {
    %c0_i32 = arith.constant 0 : i32
    %c0_i32_0 = arith.constant 0 : i32
    %c0_i32_1 = arith.constant 0 : i32
    return %c0_i32, %c0_i32_0 : i32, i32
  }
  func.func @transform_3(%arg0: i32) -> (i32, i32) {
    %c0_i32 = arith.constant 0 : i32
    %c0_i32_0 = arith.constant 0 : i32
    %c0_i32_1 = arith.constant 0 : i32
    return %c0_i32, %c0_i32_0 : i32, i32
  }
  func.func @transform_4(%arg0: i32) -> (i32, i32) {
    %c0_i32 = arith.constant 0 : i32
    %c0_i32_0 = arith.constant 0 : i32
    %c0_i32_1 = arith.constant 0 : i32
    return %c0_i32, %c0_i32_0 : i32, i32
  }
  func.func @transform_5(%arg0: i32) -> (i32, i32) {
    %c0_i32 = arith.constant 0 : i32
    %c0_i32_0 = arith.constant 0 : i32
    return %arg0, %c0_i32 : i32, i32
  }
}

</mosaic_0001>

<llo_original>
// kernel: tpu_custom_call.1
$region0: #{tpu_custom_call.1}
  #allocation0 [shape = 'u32[]', space=smem, size = 0x4, offset = 0x4, fixed_abs, tag = 'smem constant byte address 0x4 - core index']
  #allocation1 [shape = 'u32[144,128]{1,0:T(1,128)}', space=vmem, size = 0x12000, scoped, tag = 'internal scratch']
  %s0 = inlined_call_operand.hbm [shape: f32[8,768], index: 0, kind: input, shape index: {}]
  %s1 = inlined_call_operand.hbm [shape: bf16[768,384], index: 1, kind: input, shape index: {}]
  %s2 = inlined_call_operand.vmem [shape: f32[1,384], index: 2, kind: input, shape index: {}]
  %s3 = inlined_call_operand.hbm [shape: bf16[384,128], index: 3, kind: input, shape index: {}]
  %s4 = inlined_call_operand.vmem [shape: f32[1,128], index: 4, kind: input, shape index: {}]
  %s5 = inlined_call_operand.vmem [shape: f32[8,2], index: 5, kind: output, shape index: {}]
  %s6 = sld [smem:[#allocation0]]
  $region42: #{tpu_custom_call.1} parent=0
    _
  %s8 = ssub.s32 1, %s6
  %s9 = scalar_select 0, %s8, %s6
  $region1: #{tpu_custom_call.1} parent=0
    #allocation2 [shape = 'u8[24576]{0}', space=vmem, size = 0x6000, scoped, tag = 'input window, operand 0, single buffered']
    #allocation3 [shape = 's32[1]{0}', space=sflag, size = 0x4, scoped, tag = 'scoped memory for tpu_custom_call.1']
    #allocation4 [shape = 'u8[589824]{0}', space=vmem, size = 0x90000, scoped, tag = 'input window, operand 1, single buffered']
    #allocation5 [shape = 's32[1]{0}', space=sflag, size = 0x4, scoped, tag = 'scoped memory for tpu_custom_call.1']
    #allocation6 [shape = 'u8[98304]{0}', space=vmem, size = 0x18000, scoped, tag = 'input window, operand 3, single buffered']
    %10 = vsyncpa [#allocation3], 0
    %11 = vsyncpa [#allocation5], 0
    // Predicated region
    $region2: #{tpu_custom_call.1} parent=1 // pred_check
      _
    $region3: #{tpu_custom_call.1} parent=1 // pred_check_branch
      %13 = sbr.rel (0) target = $region5
    $region4: #{tpu_custom_call.1} parent=1 // pred_region
      %s15 = ssub.s32 768, 768
      %16 = vsyncadd [#allocation3], %s15
      %s18 = sshll.u32 [#allocation2], 4
      %s19 = int_to_ptr.vmem [resolvable:$true] %s18
      %21 = dma.hbm_to_vmem [thread:$0]  %s0, 768, %s19, [#allocation3]
    $region5: #{tpu_custom_call.1} parent=1 // pred_fallthru
      _
    // Predicated region
    $region6: #{tpu_custom_call.1} parent=1 // pred_check
      _
    $region7: #{tpu_custom_call.1} parent=1 // pred_check_branch
      %23 = sbr.rel (0) target = $region9
    $region8: #{tpu_custom_call.1} parent=1 // pred_region
      %s25 = ssub.s32 18432, 18432
      %26 = vsyncadd [#allocation5], %s25
      %s27 = sshll.u32 [#allocation4], 4
      %s28 = int_to_ptr.vmem [resolvable:$true] %s27
      %33 = dma.hbm_to_vmem [thread:$0]  %s1, 18432, %s28, [#allocation5], 192, 192, 12
    $region9: #{tpu_custom_call.1} parent=1 // pred_fallthru
      _
    // Predicated region
    $region10: #{tpu_custom_call.1} parent=1 // pred_check
      _
    $region11: #{tpu_custom_call.1} parent=1 // pred_check_branch
      %35 = sbr.rel (0) target = $region13
    $region12: #{tpu_custom_call.1} parent=1 // pred_region
      _
    $region13: #{tpu_custom_call.1} parent=1 // pred_fallthru
      _
    // Predicated region
    $region14: #{tpu_custom_call.1} parent=1 // pred_check
      _
    $region15: #{tpu_custom_call.1} parent=1 // pred_check_branch
      %37 = sbr.rel (0) target = $region17
    $region16: #{tpu_custom_call.1} parent=1 // pred_region
      %s39 = ssub.s32 3072, 3072
      %40 = vsyncadd [#allocation5], %s39
      %s41 = sshll.u32 [#allocation6], 4
      %s42 = int_to_ptr.vmem [resolvable:$true] %s41
      %47 = dma.hbm_to_vmem [thread:$0]  %s3, 3072, %s42, [#allocation5], 64, 64, 4
    $region17: #{tpu_custom_call.1} parent=1 // pred_fallthru
      _
    // Predicated region
    $region18: #{tpu_custom_call.1} parent=1 // pred_check
      _
    $region19: #{tpu_custom_call.1} parent=1 // pred_check_branch
      %49 = sbr.rel (0) target = $region21
    $region20: #{tpu_custom_call.1} parent=1 // pred_region
      _
    $region21: #{tpu_custom_call.1} parent=1 // pred_fallthru
      _
    // Predicated region
    $region22: #{tpu_custom_call.1} parent=1 // pred_check
      _
    $region23: #{tpu_custom_call.1} parent=1 // pred_check_branch
      %51 = sbr.rel (0) target = $region25
    $region24: #{tpu_custom_call.1} parent=1 // pred_region
      %52 = dma.done [#allocation3], 768
    $region25: #{tpu_custom_call.1} parent=1 // pred_fallthru
      _
    // Predicated region
    $region26: #{tpu_custom_call.1} parent=1 // pred_check
      _
    $region27: #{tpu_custom_call.1} parent=1 // pred_check_branch
      %54 = sbr.rel (0) target = $region29
    $region28: #{tpu_custom_call.1} parent=1 // pred_region
      %55 = dma.done [#allocation5], 18432
    $region29: #{tpu_custom_call.1} parent=1 // pred_fallthru
      _
    // Predicated region
    $region30: #{tpu_custom_call.1} parent=1 // pred_check
      _
    $region31: #{tpu_custom_call.1} parent=1 // pred_check_branch
      %57 = sbr.rel (0) target = $region33
    $region32: #{tpu_custom_call.1} parent=1 // pred_region
      %58 = dma.done [#allocation5], 3072
    $region33: #{tpu_custom_call.1} parent=1 // pred_fallthru
      _
    %v60 = vld [vmem:[#allocation2] sm:$0xff]
    %v61 = vld [vmem:[#allocation2 + $0x8] sm:$0xff]
    %v62 = vld [vmem:[#allocation2 + $0x10] sm:$0xff]
    %v63 = vld [vmem:[#allocation2 + $0x18] sm:$0xff]
    %v64 = vld [vmem:[#allocation2 + $0x20] sm:$0xff]
    %v65 = vld [vmem:[#allocation2 + $0x28] sm:$0xff]
    %v66 = vpack.c.bf16 %v60, %v60
    %v67 = vpack.c.bf16 %v61, %v61
    %v68 = vpack.c.bf16 %v62, %v62
    %v69 = vpack.c.bf16 %v63, %v63
    %v70 = vpack.c.bf16 %v64, %v64
    %v71 = vpack.c.bf16 %v65, %v65
    %v72 = vld [vmem:[#allocation4] sm:$0xff]
    %v73 = vld [vmem:[#allocation4 + $0x8] sm:$0xf]
    %v74 = vld [vmem:[#allocation4 + $0xc] sm:$0xff]
    %v75 = vld [vmem:[#allocation4 + $0x14] sm:$0xf]
    %v76 = vld [vmem:[#allocation4 + $0x18] sm:$0xff]
    %v77 = vld [vmem:[#allocation4 + $0x20] sm:$0xf]
    %v78 = vld [vmem:[#allocation4 + $0x24] sm:$0xff]
    %v79 = vld [vmem:[#allocation4 + $0x2c] sm:$0xf]
    %v80 = vld [vmem:[#allocation4 + $0x30] sm:$0xff]
    %v81 = vld [vmem:[#allocation4 + $0x38] sm:$0xf]
    %v82 = vld [vmem:[#allocation4 + $0x3c] sm:$0xff]
    %v83 = vld [vmem:[#allocation4 + $0x44] sm:$0xf]
    %v84 = vld [vmem:[#allocation4 + $0x48] sm:$0xff]
    %v85 = vld [vmem:[#allocation4 + $0x50] sm:$0xf]
    %v86 = vld [vmem:[#allocation4 + $0x54] sm:$0xff]
    %v87 = vld [vmem:[#allocation4 + $0x5c] sm:$0xf]
    %v88 = vld [vmem:[#allocation4 + $0x60] sm:$0xff]
    %v89 = vld [vmem:[#allocation4 + $0x68] sm:$0xf]
    %v90 = vld [vmem:[#allocation4 + $0x6c] sm:$0xff]
    %v91 = vld [vmem:[#allocation4 + $0x74] sm:$0xf]
    %v92 = vld [vmem:[#allocation4 + $0x78] sm:$0xff]
    %v93 = vld [vmem:[#allocation4 + $0x80] sm:$0xf]
    %v94 = vld [vmem:[#allocation4 + $0x84] sm:$0xff]
    %v95 = vld [vmem:[#allocation4 + $0x8c] sm:$0xf]
    %v96 = vld [vmem:[#allocation4 + $0x90] sm:$0xff]
    %v97 = vld [vmem:[#allocation4 + $0x98] sm:$0xf]
    %v98 = vld [vmem:[#allocation4 + $0x9c] sm:$0xff]
    %v99 = vld [vmem:[#allocation4 + $0xa4] sm:$0xf]
    %v100 = vld [vmem:[#allocation4 + $0xa8] sm:$0xff]
    %v101 = vld [vmem:[#allocation4 + $0xb0] sm:$0xf]
    %v102 = vld [vmem:[#allocation4 + $0xb4] sm:$0xff]
    %v103 = vld [vmem:[#allocation4 + $0xbc] sm:$0xf]
    %v104 = vld [vmem:[#allocation4 + $0xc0] sm:$0xff]
    %v105 = vld [vmem:[#allocation4 + $0xc8] sm:$0xf]
    %v106 = vld [vmem:[#allocation4 + $0xcc] sm:$0xff]
    %v107 = vld [vmem:[#allocation4 + $0xd4] sm:$0xf]
    %v108 = vld [vmem:[#allocation4 + $0xd8] sm:$0xff]
    %v109 = vld [vmem:[#allocation4 + $0xe0] sm:$0xf]
    %v110 = vld [vmem:[#allocation4 + $0xe4] sm:$0xff]
    %v111 = vld [vmem:[#allocation4 + $0xec] sm:$0xf]
    %v112 = vld [vmem:[#allocation4 + $0xf0] sm:$0xff]
    %v113 = vld [vmem:[#allocation4 + $0xf8] sm:$0xf]
    %v114 = vld [vmem:[#allocation4 + $0xfc] sm:$0xff]
    %v115 = vld [vmem:[#allocation4 + $0x104] sm:$0xf]
    %v116 = vld [vmem:[#allocation4 + $0x108] sm:$0xff]
    %v117 = vld [vmem:[#allocation4 + $0x110] sm:$0xf]
    %v118 = vld [vmem:[#allocation4 + $0x114] sm:$0xff]
    %v119 = vld [vmem:[#allocation4 + $0x11c] sm:$0xf]
    %v120 = vld [vmem:[#allocation4 + $0x120] sm:$0xff]
    %v121 = vld [vmem:[#allocation4 + $0x128] sm:$0xf]
    %v122 = vld [vmem:[#allocation4 + $0x12c] sm:$0xff]
    %v123 = vld [vmem:[#allocation4 + $0x134] sm:$0xf]
    %v124 = vld [vmem:[#allocation4 + $0x138] sm:$0xff]
    %v125 = vld [vmem:[#allocation4 + $0x140] sm:$0xf]
    %v126 = vld [vmem:[#allocation4 + $0x144] sm:$0xff]
    %v127 = vld [vmem:[#allocation4 + $0x14c] sm:$0xf]
    %v128 = vld [vmem:[#allocation4 + $0x150] sm:$0xff]
    %v129 = vld [vmem:[#allocation4 + $0x158] sm:$0xf]
    %v130 = vld [vmem:[#allocation4 + $0x15c] sm:$0xff]
    %v131 = vld [vmem:[#allocation4 + $0x164] sm:$0xf]
    %v132 = vld [vmem:[#allocation4 + $0x168] sm:$0xff]
    %v133 = vld [vmem:[#allocation4 + $0x170] sm:$0xf]
    %v134 = vld [vmem:[#allocation4 + $0x174] sm:$0xff]
    %v135 = vld [vmem:[#allocation4 + $0x17c] sm:$0xf]
    %v136 = vld [vmem:[#allocation4 + $0x180] sm:$0xff]
    %v137 = vld [vmem:[#allocation4 + $0x188] sm:$0xf]
    %v138 = vld [vmem:[#allocation4 + $0x18c] sm:$0xff]
    %v139 = vld [vmem:[#allocation4 + $0x194] sm:$0xf]
    %v140 = vld [vmem:[#allocation4 + $0x198] sm:$0xff]
    %v141 = vld [vmem:[#allocation4 + $0x1a0] sm:$0xf]
    %v142 = vld [vmem:[#allocation4 + $0x1a4] sm:$0xff]
    %v143 = vld [vmem:[#allocation4 + $0x1ac] sm:$0xf]
    %v144 = vld [vmem:[#allocation4 + $0x1b0] sm:$0xff]
    %v145 = vld [vmem:[#allocation4 + $0x1b8] sm:$0xf]
    %v146 = vld [vmem:[#allocation4 + $0x1bc] sm:$0xff]
    %v147 = vld [vmem:[#allocation4 + $0x1c4] sm:$0xf]
    %v148 = vld [vmem:[#allocation4 + $0x1c8] sm:$0xff]
    %v149 = vld [vmem:[#allocation4 + $0x1d0] sm:$0xf]
    %v150 = vld [vmem:[#allocation4 + $0x1d4] sm:$0xff]
    %v151 = vld [vmem:[#allocation4 + $0x1dc] sm:$0xf]
    %v152 = vld [vmem:[#allocation4 + $0x1e0] sm:$0xff]
    %v153 = vld [vmem:[#allocation4 + $0x1e8] sm:$0xf]
    %v154 = vld [vmem:[#allocation4 + $0x1ec] sm:$0xff]
    %v155 = vld [vmem:[#allocation4 + $0x1f4] sm:$0xf]
    %v156 = vld [vmem:[#allocation4 + $0x1f8] sm:$0xff]
    %v157 = vld [vmem:[#allocation4 + $0x200] sm:$0xf]
    %v158 = vld [vmem:[#allocation4 + $0x204] sm:$0xff]
    %v159 = vld [vmem:[#allocation4 + $0x20c] sm:$0xf]
    %v160 = vld [vmem:[#allocation4 + $0x210] sm:$0xff]
    %v161 = vld [vmem:[#allocation4 + $0x218] sm:$0xf]
    %v162 = vld [vmem:[#allocation4 + $0x21c] sm:$0xff]
    %v163 = vld [vmem:[#allocation4 + $0x224] sm:$0xf]
    %v164 = vld [vmem:[#allocation4 + $0x228] sm:$0xff]
    %v165 = vld [vmem:[#allocation4 + $0x230] sm:$0xf]
    %v166 = vld [vmem:[#allocation4 + $0x234] sm:$0xff]
    %v167 = vld [vmem:[#allocation4 + $0x23c] sm:$0xf]
    %v168 = vld [vmem:[#allocation4 + $0x240] sm:$0xff]
    %v169 = vld [vmem:[#allocation4 + $0x248] sm:$0xf]
    %v170 = vld [vmem:[#allocation4 + $0x24c] sm:$0xff]
    %v171 = vld [vmem:[#allocation4 + $0x254] sm:$0xf]
    %v172 = vld [vmem:[#allocation4 + $0x258] sm:$0xff]
    %v173 = vld [vmem:[#allocation4 + $0x260] sm:$0xf]
    %v174 = vld [vmem:[#allocation4 + $0x264] sm:$0xff]
    %v175 = vld [vmem:[#allocation4 + $0x26c] sm:$0xf]
    %v176 = vld [vmem:[#allocation4 + $0x270] sm:$0xff]
    %v177 = vld [vmem:[#allocation4 + $0x278] sm:$0xf]
    %v178 = vld [vmem:[#allocation4 + $0x27c] sm:$0xff]
    %v179 = vld [vmem:[#allocation4 + $0x284] sm:$0xf]
    %v180 = vld [vmem:[#allocation4 + $0x288] sm:$0xff]
    %v181 = vld [vmem:[#allocation4 + $0x290] sm:$0xf]
    %v182 = vld [vmem:[#allocation4 + $0x294] sm:$0xff]
    %v183 = vld [vmem:[#allocation4 + $0x29c] sm:$0xf]
    %v184 = vld [vmem:[#allocation4 + $0x2a0] sm:$0xff]
    %v185 = vld [vmem:[#allocation4 + $0x2a8] sm:$0xf]
    %v186 = vld [vmem:[#allocation4 + $0x2ac] sm:$0xff]
    %v187 = vld [vmem:[#allocation4 + $0x2b4] sm:$0xf]
    %v188 = vld [vmem:[#allocation4 + $0x2b8] sm:$0xff]
    %v189 = vld [vmem:[#allocation4 + $0x2c0] sm:$0xf]
    %v190 = vld [vmem:[#allocation4 + $0x2c4] sm:$0xff]
    %v191 = vld [vmem:[#allocation4 + $0x2cc] sm:$0xf]
    %v192 = vld [vmem:[#allocation4 + $0x2d0] sm:$0xff]
    %v193 = vld [vmem:[#allocation4 + $0x2d8] sm:$0xf]
    %v194 = vld [vmem:[#allocation4 + $0x2dc] sm:$0xff]
    %v195 = vld [vmem:[#allocation4 + $0x2e4] sm:$0xf]
    %v196 = vld [vmem:[#allocation4 + $0x2e8] sm:$0xff]
    %v197 = vld [vmem:[#allocation4 + $0x2f0] sm:$0xf]
    %v198 = vld [vmem:[#allocation4 + $0x2f4] sm:$0xff]
    %v199 = vld [vmem:[#allocation4 + $0x2fc] sm:$0xf]
    %v200 = vld [vmem:[#allocation4 + $0x300] sm:$0xff]
    %v201 = vld [vmem:[#allocation4 + $0x308] sm:$0xf]
    %v202 = vld [vmem:[#allocation4 + $0x30c] sm:$0xff]
    %v203 = vld [vmem:[#allocation4 + $0x314] sm:$0xf]
    %v204 = vld [vmem:[#allocation4 + $0x318] sm:$0xff]
    %v205 = vld [vmem:[#allocation4 + $0x320] sm:$0xf]
    %v206 = vld [vmem:[#allocation4 + $0x324] sm:$0xff]
    %v207 = vld [vmem:[#allocation4 + $0x32c] sm:$0xf]
    %v208 = vld [vmem:[#allocation4 + $0x330] sm:$0xff]
    %v209 = vld [vmem:[#allocation4 + $0x338] sm:$0xf]
    %v210 = vld [vmem:[#allocation4 + $0x33c] sm:$0xff]
    %v211 = vld [vmem:[#allocation4 + $0x344] sm:$0xf]
    %v212 = vld [vmem:[#allocation4 + $0x348] sm:$0xff]
    %v213 = vld [vmem:[#allocation4 + $0x350] sm:$0xf]
    %v214 = vld [vmem:[#allocation4 + $0x354] sm:$0xff]
    %v215 = vld [vmem:[#allocation4 + $0x35c] sm:$0xf]
    %v216 = vld [vmem:[#allocation4 + $0x360] sm:$0xff]
    %v217 = vld [vmem:[#allocation4 + $0x368] sm:$0xf]
    %v218 = vld [vmem:[#allocation4 + $0x36c] sm:$0xff]
    %v219 = vld [vmem:[#allocation4 + $0x374] sm:$0xf]
    %v220 = vld [vmem:[#allocation4 + $0x378] sm:$0xff]
    %v221 = vld [vmem:[#allocation4 + $0x380] sm:$0xf]
    %v222 = vld [vmem:[#allocation4 + $0x384] sm:$0xff]
    %v223 = vld [vmem:[#allocation4 + $0x38c] sm:$0xf]
    %v224 = vld [vmem:[#allocation4 + $0x390] sm:$0xff]
    %v225 = vld [vmem:[#allocation4 + $0x398] sm:$0xf]
    %v226 = vld [vmem:[#allocation4 + $0x39c] sm:$0xff]
    %v227 = vld [vmem:[#allocation4 + $0x3a4] sm:$0xf]
    %v228 = vld [vmem:[#allocation4 + $0x3a8] sm:$0xff]
    %v229 = vld [vmem:[#allocation4 + $0x3b0] sm:$0xf]
    %v230 = vld [vmem:[#allocation4 + $0x3b4] sm:$0xff]
    %v231 = vld [vmem:[#allocation4 + $0x3bc] sm:$0xf]
    %v232 = vld [vmem:[#allocation4 + $0x3c0] sm:$0xff]
    %v233 = vld [vmem:[#allocation4 + $0x3c8] sm:$0xf]
    %v234 = vld [vmem:[#allocation4 + $0x3cc] sm:$0xff]
    %v235 = vld [vmem:[#allocation4 + $0x3d4] sm:$0xf]
    %v236 = vld [vmem:[#allocation4 + $0x3d8] sm:$0xff]
    %v237 = vld [vmem:[#allocation4 + $0x3e0] sm:$0xf]
    %v238 = vld [vmem:[#allocation4 + $0x3e4] sm:$0xff]
    %v239 = vld [vmem:[#allocation4 + $0x3ec] sm:$0xf]
    %v240 = vld [vmem:[#allocation4 + $0x3f0] sm:$0xff]
    %v241 = vld [vmem:[#allocation4 + $0x3f8] sm:$0xf]
    %v242 = vld [vmem:[#allocation4 + $0x3fc] sm:$0xff]
    %v243 = vld [vmem:[#allocation4 + $0x404] sm:$0xf]
    %v244 = vld [vmem:[#allocation4 + $0x408] sm:$0xff]
    %v245 = vld [vmem:[#allocation4 + $0x410] sm:$0xf]
    %v246 = vld [vmem:[#allocation4 + $0x414] sm:$0xff]
    %v247 = vld [vmem:[#allocation4 + $0x41c] sm:$0xf]
    %v248 = vld [vmem:[#allocation4 + $0x420] sm:$0xff]
    %v249 = vld [vmem:[#allocation4 + $0x428] sm:$0xf]
    %v250 = vld [vmem:[#allocation4 + $0x42c] sm:$0xff]
    %v251 = vld [vmem:[#allocation4 + $0x434] sm:$0xf]
    %v252 = vld [vmem:[#allocation4 + $0x438] sm:$0xff]
    %v253 = vld [vmem:[#allocation4 + $0x440] sm:$0xf]
    %v254 = vld [vmem:[#allocation4 + $0x444] sm:$0xff]
    %v255 = vld [vmem:[#allocation4 + $0x44c] sm:$0xf]
    %v256 = vld [vmem:[#allocation4 + $0x450] sm:$0xff]
    %v257 = vld [vmem:[#allocation4 + $0x458] sm:$0xf]
    %v258 = vld [vmem:[#allocation4 + $0x45c] sm:$0xff]
    %v259 = vld [vmem:[#allocation4 + $0x464] sm:$0xf]
    %v260 = vld [vmem:[#allocation4 + $0x468] sm:$0xff]
    %v261 = vld [vmem:[#allocation4 + $0x470] sm:$0xf]
    %v262 = vld [vmem:[#allocation4 + $0x474] sm:$0xff]
    %v263 = vld [vmem:[#allocation4 + $0x47c] sm:$0xf]
    %v264 = vld [vmem:[%s2] sm:$0x7]
    %v266 = vlaneseq
    %v267 = vshrl.u32 %v266, 7
    %v268 = vsub.s32 0, %v267
    %v269 = vrot.slane %v264, %v268
    %v270 = vlaneseq
    %v271 = vshrl.u32 %v270, 7
    %v272 = vsub.s32 1, %v271
    %v273 = vrot.slane %v264, %v272
    %v274 = vlaneseq
    %v275 = vshrl.u32 %v274, 7
    %v276 = vsub.s32 2, %v275
    %v277 = vrot.slane %v264, %v276
    %v473 = vunpack.c.l.b16 %v72
    %v474 = vunpack.c.h.b16 %v72
    %v475 = vunpack.c.l.b16 %v73
    %v476 = vunpack.c.l.b16 %v74
    %v477 = vunpack.c.h.b16 %v74
    %v478 = vunpack.c.l.b16 %v75
    %v479 = vunpack.c.l.b16 %v76
    %v480 = vunpack.c.h.b16 %v76
    %v481 = vunpack.c.l.b16 %v77
    %v482 = vunpack.c.l.b16 %v78
    %v483 = vunpack.c.h.b16 %v78
    %v484 = vunpack.c.l.b16 %v79
    %v485 = vunpack.c.l.b16 %v80
    %v486 = vunpack.c.h.b16 %v80
    %v487 = vunpack.c.l.b16 %v81
    %v488 = vunpack.c.l.b16 %v82
    %v489 = vunpack.c.h.b16 %v82
    %v490 = vunpack.c.l.b16 %v83
    %v491 = vunpack.c.l.b16 %v84
    %v492 = vunpack.c.h.b16 %v84
    %v493 = vunpack.c.l.b16 %v85
    %v494 = vunpack.c.l.b16 %v86
    %v495 = vunpack.c.h.b16 %v86
    %v496 = vunpack.c.l.b16 %v87
    %v497 = vunpack.c.l.b16 %v88
    %v498 = vunpack.c.h.b16 %v88
    %v499 = vunpack.c.l.b16 %v89
    %v500 = vunpack.c.l.b16 %v90
    %v501 = vunpack.c.h.b16 %v90
    %v502 = vunpack.c.l.b16 %v91
    %v503 = vunpack.c.l.b16 %v92
    %v504 = vunpack.c.h.b16 %v92
    %v505 = vunpack.c.l.b16 %v93
    %v506 = vunpack.c.l.b16 %v94
    %v507 = vunpack.c.h.b16 %v94
    %v508 = vunpack.c.l.b16 %v95
    %v509 = vunpack.c.l.b16 %v96
    %v510 = vunpack.c.h.b16 %v96
    %v511 = vunpack.c.l.b16 %v97
    %v512 = vunpack.c.l.b16 %v98
    %v513 = vunpack.c.h.b16 %v98
    %v514 = vunpack.c.l.b16 %v99
    %v515 = vunpack.c.l.b16 %v100
    %v516 = vunpack.c.h.b16 %v100
    %v517 = vunpack.c.l.b16 %v101
    %v518 = vunpack.c.l.b16 %v102
    %v519 = vunpack.c.h.b16 %v102
    %v520 = vunpack.c.l.b16 %v103
    %v521 = vunpack.c.l.b16 %v104
    %v522 = vunpack.c.h.b16 %v104
    %v523 = vunpack.c.l.b16 %v105
    %v524 = vunpack.c.l.b16 %v106
    %v525 = vunpack.c.h.b16 %v106
    %v526 = vunpack.c.l.b16 %v107
    %v527 = vunpack.c.l.b16 %v108
    %v528 = vunpack.c.h.b16 %v108
    %v529 = vunpack.c.l.b16 %v109
    %v530 = vunpack.c.l.b16 %v110
    %v531 = vunpack.c.h.b16 %v110
    %v532 = vunpack.c.l.b16 %v111
    %v533 = vunpack.c.l.b16 %v112
    %v534 = vunpack.c.h.b16 %v112
    %v535 = vunpack.c.l.b16 %v113
    %v536 = vunpack.c.l.b16 %v114
    %v537 = vunpack.c.h.b16 %v114
    %v538 = vunpack.c.l.b16 %v115
    %v539 = vunpack.c.l.b16 %v116
    %v540 = vunpack.c.h.b16 %v116
    %v541 = vunpack.c.l.b16 %v117
    %v542 = vunpack.c.l.b16 %v118
    %v543 = vunpack.c.h.b16 %v118
    %v544 = vunpack.c.l.b16 %v119
    %v545 = vunpack.c.l.b16 %v120
    %v546 = vunpack.c.h.b16 %v120
    %v547 = vunpack.c.l.b16 %v121
    %v548 = vunpack.c.l.b16 %v122
    %v549 = vunpack.c.h.b16 %v122
    %v550 = vunpack.c.l.b16 %v123
    %v551 = vunpack.c.l.b16 %v124
    %v552 = vunpack.c.h.b16 %v124
    %v553 = vunpack.c.l.b16 %v125
    %v554 = vunpack.c.l.b16 %v126
    %v555 = vunpack.c.h.b16 %v126
    %v556 = vunpack.c.l.b16 %v127
    %v557 = vunpack.c.l.b16 %v128
    %v558 = vunpack.c.h.b16 %v128
    %v559 = vunpack.c.l.b16 %v129
    %v560 = vunpack.c.l.b16 %v130
    %v561 = vunpack.c.h.b16 %v130
    %v562 = vunpack.c.l.b16 %v131
    %v563 = vunpack.c.l.b16 %v132
    %v564 = vunpack.c.h.b16 %v132
    %v565 = vunpack.c.l.b16 %v133
    %v566 = vunpack.c.l.b16 %v134
    %v567 = vunpack.c.h.b16 %v134
    %v568 = vunpack.c.l.b16 %v135
    %v569 = vunpack.c.l.b16 %v136
    %v570 = vunpack.c.h.b16 %v136
    %v571 = vunpack.c.l.b16 %v137
    %v572 = vunpack.c.l.b16 %v138
    %v573 = vunpack.c.h.b16 %v138
    %v574 = vunpack.c.l.b16 %v139
    %v575 = vunpack.c.l.b16 %v140
    %v576 = vunpack.c.h.b16 %v140
    %v577 = vunpack.c.l.b16 %v141
    %v578 = vunpack.c.l.b16 %v142
    %v579 = vunpack.c.h.b16 %v142
    %v580 = vunpack.c.l.b16 %v143
    %v581 = vunpack.c.l.b16 %v144
    %v582 = vunpack.c.h.b16 %v144
    %v583 = vunpack.c.l.b16 %v145
    %v584 = vunpack.c.l.b16 %v146
    %v585 = vunpack.c.h.b16 %v146
    %v586 = vunpack.c.l.b16 %v147
    %v587 = vunpack.c.l.b16 %v148
    %v588 = vunpack.c.h.b16 %v148
    %v589 = vunpack.c.l.b16 %v149
    %v590 = vunpack.c.l.b16 %v150
    %v591 = vunpack.c.h.b16 %v150
    %v592 = vunpack.c.l.b16 %v151
    %v593 = vunpack.c.l.b16 %v152
    %v594 = vunpack.c.h.b16 %v152
    %v595 = vunpack.c.l.b16 %v153
    %v596 = vunpack.c.l.b16 %v154
    %v597 = vunpack.c.h.b16 %v154
    %v598 = vunpack.c.l.b16 %v155
    %v599 = vunpack.c.l.b16 %v156
    %v600 = vunpack.c.h.b16 %v156
    %v601 = vunpack.c.l.b16 %v157
    %v602 = vunpack.c.l.b16 %v158
    %v603 = vunpack.c.h.b16 %v158
    %v604 = vunpack.c.l.b16 %v159
    %v605 = vunpack.c.l.b16 %v160
    %v606 = vunpack.c.h.b16 %v160
    %v607 = vunpack.c.l.b16 %v161
    %v608 = vunpack.c.l.b16 %v162
    %v609 = vunpack.c.h.b16 %v162
    %v610 = vunpack.c.l.b16 %v163
    %v611 = vunpack.c.l.b16 %v164
    %v612 = vunpack.c.h.b16 %v164
    %v613 = vunpack.c.l.b16 %v165
    %v614 = vunpack.c.l.b16 %v166
    %v615 = vunpack.c.h.b16 %v166
    %v616 = vunpack.c.l.b16 %v167
    %v617 = vunpack.c.l.b16 %v168
    %v618 = vunpack.c.h.b16 %v168
    %v619 = vunpack.c.l.b16 %v169
    %v620 = vunpack.c.l.b16 %v170
    %v621 = vunpack.c.h.b16 %v170
    %v622 = vunpack.c.l.b16 %v171
    %v623 = vunpack.c.l.b16 %v172
    %v624 = vunpack.c.h.b16 %v172
    %v625 = vunpack.c.l.b16 %v173
    %v626 = vunpack.c.l.b16 %v174
    %v627 = vunpack.c.h.b16 %v174
    %v628 = vunpack.c.l.b16 %v175
    %v629 = vunpack.c.l.b16 %v176
    %v630 = vunpack.c.h.b16 %v176
    %v631 = vunpack.c.l.b16 %v177
    %v632 = vunpack.c.l.b16 %v178
    %v633 = vunpack.c.h.b16 %v178
    %v634 = vunpack.c.l.b16 %v179
    %v635 = vunpack.c.l.b16 %v180
    %v636 = vunpack.c.h.b16 %v180
    %v637 = vunpack.c.l.b16 %v181
    %v638 = vunpack.c.l.b16 %v182
    %v639 = vunpack.c.h.b16 %v182
    %v640 = vunpack.c.l.b16 %v183
    %v641 = vunpack.c.l.b16 %v184
    %v642 = vunpack.c.h.b16 %v184
    %v643 = vunpack.c.l.b16 %v185
    %v644 = vunpack.c.l.b16 %v186
    %v645 = vunpack.c.h.b16 %v186
    %v646 = vunpack.c.l.b16 %v187
    %v647 = vunpack.c.l.b16 %v188
    %v648 = vunpack.c.h.b16 %v188
    %v649 = vunpack.c.l.b16 %v189
    %v650 = vunpack.c.l.b16 %v190
    %v651 = vunpack.c.h.b16 %v190
    %v652 = vunpack.c.l.b16 %v191
    %v653 = vunpack.c.l.b16 %v192
    %v654 = vunpack.c.h.b16 %v192
    %v655 = vunpack.c.l.b16 %v193
    %v656 = vunpack.c.l.b16 %v194
    %v657 = vunpack.c.h.b16 %v194
    %v658 = vunpack.c.l.b16 %v195
    %v659 = vunpack.c.l.b16 %v196
    %v660 = vunpack.c.h.b16 %v196
    %v661 = vunpack.c.l.b16 %v197
    %v662 = vunpack.c.l.b16 %v198
    %v663 = vunpack.c.h.b16 %v198
    %v664 = vunpack.c.l.b16 %v199
    %v665 = vunpack.c.l.b16 %v200
    %v666 = vunpack.c.h.b16 %v200
    %v667 = vunpack.c.l.b16 %v201
    %v668 = vunpack.c.l.b16 %v202
    %v669 = vunpack.c.h.b16 %v202
    %v670 = vunpack.c.l.b16 %v203
    %v671 = vunpack.c.l.b16 %v204
    %v672 = vunpack.c.h.b16 %v204
    %v673 = vunpack.c.l.b16 %v205
    %v674 = vunpack.c.l.b16 %v206
    %v675 = vunpack.c.h.b16 %v206
    %v676 = vunpack.c.l.b16 %v207
    %v677 = vunpack.c.l.b16 %v208
    %v678 = vunpack.c.h.b16 %v208
    %v679 = vunpack.c.l.b16 %v209
    %v680 = vunpack.c.l.b16 %v210
    %v681 = vunpack.c.h.b16 %v210
    %v682 = vunpack.c.l.b16 %v211
    %v683 = vunpack.c.l.b16 %v212
    %v684 = vunpack.c.h.b16 %v212
    %v685 = vunpack.c.l.b16 %v213
    %v686 = vunpack.c.l.b16 %v214
    %v687 = vunpack.c.h.b16 %v214
    %v688 = vunpack.c.l.b16 %v215
    %v689 = vunpack.c.l.b16 %v216
    %v690 = vunpack.c.h.b16 %v216
    %v691 = vunpack.c.l.b16 %v217
    %v692 = vunpack.c.l.b16 %v218
    %v693 = vunpack.c.h.b16 %v218
    %v694 = vunpack.c.l.b16 %v219
    %v695 = vunpack.c.l.b16 %v220
    %v696 = vunpack.c.h.b16 %v220
    %v697 = vunpack.c.l.b16 %v221
    %v698 = vunpack.c.l.b16 %v222
    %v699 = vunpack.c.h.b16 %v222
    %v700 = vunpack.c.l.b16 %v223
    %v701 = vunpack.c.l.b16 %v224
    %v702 = vunpack.c.h.b16 %v224
    %v703 = vunpack.c.l.b16 %v225
    %v704 = vunpack.c.l.b16 %v226
    %v705 = vunpack.c.h.b16 %v226
    %v706 = vunpack.c.l.b16 %v227
    %v707 = vunpack.c.l.b16 %v228
    %v708 = vunpack.c.h.b16 %v228
    %v709 = vunpack.c.l.b16 %v229
    %v710 = vunpack.c.l.b16 %v230
    %v711 = vunpack.c.h.b16 %v230
    %v712 = vunpack.c.l.b16 %v231
    %v713 = vunpack.c.l.b16 %v232
    %v714 = vunpack.c.h.b16 %v232
    %v715 = vunpack.c.l.b16 %v233
    %v716 = vunpack.c.l.b16 %v234
    %v717 = vunpack.c.h.b16 %v234
    %v718 = vunpack.c.l.b16 %v235
    %v719 = vunpack.c.l.b16 %v236
    %v720 = vunpack.c.h.b16 %v236
    %v721 = vunpack.c.l.b16 %v237
    %v722 = vunpack.c.l.b16 %v238
    %v723 = vunpack.c.h.b16 %v238
    %v724 = vunpack.c.l.b16 %v239
    %v725 = vunpack.c.l.b16 %v240
    %v726 = vunpack.c.h.b16 %v240
    %v727 = vunpack.c.l.b16 %v241
    %v728 = vunpack.c.l.b16 %v242
    %v729 = vunpack.c.h.b16 %v242
    %v730 = vunpack.c.l.b16 %v243
    %v731 = vunpack.c.l.b16 %v244
    %v732 = vunpack.c.h.b16 %v244
    %v733 = vunpack.c.l.b16 %v245
    %v734 = vunpack.c.l.b16 %v246
    %v735 = vunpack.c.h.b16 %v246
    %v736 = vunpack.c.l.b16 %v247
    %v737 = vunpack.c.l.b16 %v248
    %v738 = vunpack.c.h.b16 %v248
    %v739 = vunpack.c.l.b16 %v249
    %v740 = vunpack.c.l.b16 %v250
    %v741 = vunpack.c.h.b16 %v250
    %v742 = vunpack.c.l.b16 %v251
    %v743 = vunpack.c.l.b16 %v252
    %v744 = vunpack.c.h.b16 %v252
    %v745 = vunpack.c.l.b16 %v253
    %v746 = vunpack.c.l.b16 %v254
    %v747 = vunpack.c.h.b16 %v254
    %v748 = vunpack.c.l.b16 %v255
    %v749 = vunpack.c.l.b16 %v256
    %v750 = vunpack.c.h.b16 %v256
    %v751 = vunpack.c.l.b16 %v257
    %v752 = vunpack.c.l.b16 %v258
    %v753 = vunpack.c.h.b16 %v258
    %v754 = vunpack.c.l.b16 %v259
    %v755 = vunpack.c.l.b16 %v260
    %v756 = vunpack.c.h.b16 %v260
    %v757 = vunpack.c.l.b16 %v261
    %v758 = vunpack.c.l.b16 %v262
    %v759 = vunpack.c.h.b16 %v262
    %v760 = vunpack.c.l.b16 %v263
    %v761 = vpack.c.b16 %v476, %v473
    %v762 = vpack.c.b16 %v477, %v474
    %v763 = vpack.c.b16 %v478, %v475
    %v764 = vpack.c.b16 %v482, %v479
    %v765 = vpack.c.b16 %v483, %v480
    %v766 = vpack.c.b16 %v484, %v481
    %v767 = vpack.c.b16 %v488, %v485
    %v768 = vpack.c.b16 %v489, %v486
    %v769 = vpack.c.b16 %v490, %v487
    %v770 = vpack.c.b16 %v494, %v491
    %v771 = vpack.c.b16 %v495, %v492
    %v772 = vpack.c.b16 %v496, %v493
    %v773 = vpack.c.b16 %v500, %v497
    %v774 = vpack.c.b16 %v501, %v498
    %v775 = vpack.c.b16 %v502, %v499
    %v776 = vpack.c.b16 %v506, %v503
    %v777 = vpack.c.b16 %v507, %v504
    %v778 = vpack.c.b16 %v508, %v505
    %v779 = vpack.c.b16 %v512, %v509
    %v780 = vpack.c.b16 %v513, %v510
    %v781 = vpack.c.b16 %v514, %v511
    %v782 = vpack.c.b16 %v518, %v515
    %v783 = vpack.c.b16 %v519, %v516
    %v784 = vpack.c.b16 %v520, %v517
    %v785 = vpack.c.b16 %v524, %v521
    %v786 = vpack.c.b16 %v525, %v522
    %v787 = vpack.c.b16 %v526, %v523
    %v788 = vpack.c.b16 %v530, %v527
    %v789 = vpack.c.b16 %v531, %v528
    %v790 = vpack.c.b16 %v532, %v529
    %v791 = vpack.c.b16 %v536, %v533
    %v792 = vpack.c.b16 %v537, %v534
    %v793 = vpack.c.b16 %v538, %v535
    %v794 = vpack.c.b16 %v542, %v539
    %v795 = vpack.c.b16 %v543, %v540
    %v796 = vpack.c.b16 %v544, %v541
    %v797 = vpack.c.b16 %v548, %v545
    %v798 = vpack.c.b16 %v549, %v546
    %v799 = vpack.c.b16 %v550, %v547
    %v800 = vpack.c.b16 %v554, %v551
    %v801 = vpack.c.b16 %v555, %v552
    %v802 = vpack.c.b16 %v556, %v553
    %v803 = vpack.c.b16 %v560, %v557
    %v804 = vpack.c.b16 %v561, %v558
    %v805 = vpack.c.b16 %v562, %v559
    %v806 = vpack.c.b16 %v566, %v563
    %v807 = vpack.c.b16 %v567, %v564
    %v808 = vpack.c.b16 %v568, %v565
    %v809 = vpack.c.b16 %v572, %v569
    %v810 = vpack.c.b16 %v573, %v570
    %v811 = vpack.c.b16 %v574, %v571
    %v812 = vpack.c.b16 %v578, %v575
    %v813 = vpack.c.b16 %v579, %v576
    %v814 = vpack.c.b16 %v580, %v577
    %v815 = vpack.c.b16 %v584, %v581
    %v816 = vpack.c.b16 %v585, %v582
    %v817 = vpack.c.b16 %v586, %v583
    %v818 = vpack.c.b16 %v590, %v587
    %v819 = vpack.c.b16 %v591, %v588
    %v820 = vpack.c.b16 %v592, %v589
    %v821 = vpack.c.b16 %v596, %v593
    %v822 = vpack.c.b16 %v597, %v594
    %v823 = vpack.c.b16 %v598, %v595
    %v824 = vpack.c.b16 %v602, %v599
    %v825 = vpack.c.b16 %v603, %v600
    %v826 = vpack.c.b16 %v604, %v601
    %v827 = vpack.c.b16 %v608, %v605
    %v828 = vpack.c.b16 %v609, %v606
    %v829 = vpack.c.b16 %v610, %v607
    %v830 = vpack.c.b16 %v614, %v611
    %v831 = vpack.c.b16 %v615, %v612
    %v832 = vpack.c.b16 %v616, %v613
    %v833 = vpack.c.b16 %v620, %v617
    %v834 = vpack.c.b16 %v621, %v618
    %v835 = vpack.c.b16 %v622, %v619
    %v836 = vpack.c.b16 %v626, %v623
    %v837 = vpack.c.b16 %v627, %v624
    %v838 = vpack.c.b16 %v628, %v625
    %v839 = vpack.c.b16 %v632, %v629
    %v840 = vpack.c.b16 %v633, %v630
    %v841 = vpack.c.b16 %v634, %v631
    %v842 = vpack.c.b16 %v638, %v635
    %v843 = vpack.c.b16 %v639, %v636
    %v844 = vpack.c.b16 %v640, %v637
    %v845 = vpack.c.b16 %v644, %v641
    %v846 = vpack.c.b16 %v645, %v642
    %v847 = vpack.c.b16 %v646, %v643
    %v848 = vpack.c.b16 %v650, %v647
    %v849 = vpack.c.b16 %v651, %v648
    %v850 = vpack.c.b16 %v652, %v649
    %v851 = vpack.c.b16 %v656, %v653
    %v852 = vpack.c.b16 %v657, %v654
    %v853 = vpack.c.b16 %v658, %v655
    %v854 = vpack.c.b16 %v662, %v659
    %v855 = vpack.c.b16 %v663, %v660
    %v856 = vpack.c.b16 %v664, %v661
    %v857 = vpack.c.b16 %v668, %v665
    %v858 = vpack.c.b16 %v669, %v666
    %v859 = vpack.c.b16 %v670, %v667
    %v860 = vpack.c.b16 %v674, %v671
    %v861 = vpack.c.b16 %v675, %v672
    %v862 = vpack.c.b16 %v676, %v673
    %v863 = vpack.c.b16 %v680, %v677
    %v864 = vpack.c.b16 %v681, %v678
    %v865 = vpack.c.b16 %v682, %v679
    %v866 = vpack.c.b16 %v686, %v683
    %v867 = vpack.c.b16 %v687, %v684
    %v868 = vpack.c.b16 %v688, %v685
    %v869 = vpack.c.b16 %v692, %v689
    %v870 = vpack.c.b16 %v693, %v690
    %v871 = vpack.c.b16 %v694, %v691
    %v872 = vpack.c.b16 %v698, %v695
    %v873 = vpack.c.b16 %v699, %v696
    %v874 = vpack.c.b16 %v700, %v697
    %v875 = vpack.c.b16 %v704, %v701
    %v876 = vpack.c.b16 %v705, %v702
    %v877 = vpack.c.b16 %v706, %v703
    %v878 = vpack.c.b16 %v710, %v707
    %v879 = vpack.c.b16 %v711, %v708
    %v880 = vpack.c.b16 %v712, %v709
    %v881 = vpack.c.b16 %v716, %v713
    %v882 = vpack.c.b16 %v717, %v714
    %v883 = vpack.c.b16 %v718, %v715
    %v884 = vpack.c.b16 %v722, %v719
    %v885 = vpack.c.b16 %v723, %v720
    %v886 = vpack.c.b16 %v724, %v721
    %v887 = vpack.c.b16 %v728, %v725
    %v888 = vpack.c.b16 %v729, %v726
    %v889 = vpack.c.b16 %v730, %v727
    %v890 = vpack.c.b16 %v734, %v731
    %v891 = vpack.c.b16 %v735, %v732
    %v892 = vpack.c.b16 %v736, %v733
    %v893 = vpack.c.b16 %v740, %v737
    %v894 = vpack.c.b16 %v741, %v738
    %v895 = vpack.c.b16 %v742, %v739
    %v896 = vpack.c.b16 %v746, %v743
    %v897 = vpack.c.b16 %v747, %v744
    %v898 = vpack.c.b16 %v748, %v745
    %v899 = vpack.c.b16 %v752, %v749
    %v900 = vpack.c.b16 %v753, %v750
    %v901 = vpack.c.b16 %v754, %v751
    %v902 = vpack.c.b16 %v758, %v755
    %v903 = vpack.c.b16 %v759, %v756
    %v904 = vpack.c.b16 %v760, %v757
    %1049 = vmatprep.subr.bf16.mxu0 %v762
    %1050 = vmatpush1.bf16.msra.mxu0 %v761
    %1051 = vmatprep.subr.bf16.mxu0 %v765
    %1052 = vmatpush1.bf16.msra.mxu0 %v764
    %1053 = vmatprep.subr.bf16.mxu0 %v768
    %1054 = vmatpush1.bf16.msra.mxu0 %v767
    %1055 = vmatprep.subr.bf16.mxu0 %v771
    %1056 = vmatpush1.bf16.msra.mxu0 %v770
    %1057 = vmatprep.subr.bf16.mxu0 %v774
    %1058 = vmatpush1.bf16.msra.mxu0 %v773
    %1059 = vmatprep.subr.bf16.mxu0 %v777
    %1060 = vmatpush1.bf16.msra.mxu0 %v776
    %1061 = vmatprep.subr.bf16.mxu0 %v780
    %1062 = vmatpush1.bf16.msra.mxu0 %v779
    %1063 = vmatprep.subr.bf16.mxu0 %v783
    %1064 = vmatpush1.bf16.msra.mxu0 %v782
    %1065 = vmatprep.subr.bf16.mxu0 %v786
    %1066 = vmatpush1.bf16.msra.mxu0 %v785
    %1067 = vmatprep.subr.bf16.mxu0 %v789
    %1068 = vmatpush1.bf16.msra.mxu0 %v788
    %1069 = vmatprep.subr.bf16.mxu0 %v792
    %1070 = vmatpush1.bf16.msra.mxu0 %v791
    %1071 = vmatprep.subr.bf16.mxu0 %v795
    %1072 = vmatpush1.bf16.msra.mxu0 %v794
    %1073 = vmatprep.subr.bf16.mxu0 %v798
    %1074 = vmatpush1.bf16.msra.mxu0 %v797
    %1075 = vmatprep.subr.bf16.mxu0 %v801
    %1076 = vmatpush1.bf16.msra.mxu0 %v800
    %1077 = vmatprep.subr.bf16.mxu0 %v804
    %1078 = vmatpush1.bf16.msra.mxu0 %v803
    %1079 = vmatprep.subr.bf16.mxu0 %v807
    %1080 = vmatpush1.bf16.msra.mxu0 %v806
    %1081 = vmatprep.mubr.bf16.mxu0 %v67
    %1082 = vmatmul.mubr.bf16.gmra.mrb[0].mxu0 %v66
    %v1083 = vpop.f32.mrb[0].mxu0
    %v1084 = vadd.f32 %v269, %v1083
    %v1085 = vpop.f32.mrb[0].mxu0
    %v1086 = vadd.f32 %v273, %v1085
    %v1087 = vpop.f32.mrb[0].mxu0
    %v1088 = vpop.f32.mrb[0].mxu0
    %1089 = vdwg.mxu0
    %1090 = vmatprep.subr.bf16.mxu0 %v810
    %1091 = vmatpush1.bf16.msra.mxu0 %v809
    %1092 = vmatprep.subr.bf16.mxu0 %v813
    %1093 = vmatpush1.bf16.msra.mxu0 %v812
    %1094 = vmatprep.subr.bf16.mxu0 %v816
    %1095 = vmatpush1.bf16.msra.mxu0 %v815
    %1096 = vmatprep.subr.bf16.mxu0 %v819
    %1097 = vmatpush1.bf16.msra.mxu0 %v818
    %1098 = vmatprep.subr.bf16.mxu0 %v822
    %1099 = vmatpush1.bf16.msra.mxu0 %v821
    %1100 = vmatprep.subr.bf16.mxu0 %v825
    %1101 = vmatpush1.bf16.msra.mxu0 %v824
    %1102 = vmatprep.subr.bf16.mxu0 %v828
    %1103 = vmatpush1.bf16.msra.mxu0 %v827
    %1104 = vmatprep.subr.bf16.mxu0 %v831
    %1105 = vmatpush1.bf16.msra.mxu0 %v830
    %1106 = vmatprep.subr.bf16.mxu0 %v834
    %1107 = vmatpush1.bf16.msra.mxu0 %v833
    %1108 = vmatprep.subr.bf16.mxu0 %v837
    %1109 = vmatpush1.bf16.msra.mxu0 %v836
    %1110 = vmatprep.subr.bf16.mxu0 %v840
    %1111 = vmatpush1.bf16.msra.mxu0 %v839
    %1112 = vmatprep.subr.bf16.mxu0 %v843
    %1113 = vmatpush1.bf16.msra.mxu0 %v842
    %1114 = vmatprep.subr.bf16.mxu0 %v846
    %1115 = vmatpush1.bf16.msra.mxu0 %v845
    %1116 = vmatprep.subr.bf16.mxu0 %v849
    %1117 = vmatpush1.bf16.msra.mxu0 %v848
    %1118 = vmatprep.subr.bf16.mxu0 %v852
    %1119 = vmatpush1.bf16.msra.mxu0 %v851
    %1120 = vmatprep.subr.bf16.mxu0 %v855
    %1121 = vmatpush1.bf16.msra.mxu0 %v854
    %1122 = vmatprep.mubr.bf16.mxu0 %v69
    %1123 = vmatmul.mubr.bf16.gmra.mrb[0].mxu0 %v68
    %v1124 = vpop.f32.mrb[0].mxu0
    %v1125 = vadd.f32 %v1084, %v1124
    %v1126 = vpop.f32.mrb[0].mxu0
    %v1127 = vadd.f32 %v1086, %v1126
    %v1128 = vpop.f32.mrb[0].mxu0
    %v1129 = vpop.f32.mrb[0].mxu0
    %1130 = vdwg.mxu0
    %1131 = vmatprep.subr.bf16.mxu0 %v858
    %1132 = vmatpush1.bf16.msra.mxu0 %v857
    %1133 = vmatprep.subr.bf16.mxu0 %v861
    %1134 = vmatpush1.bf16.msra.mxu0 %v860
    %1135 = vmatprep.subr.bf16.mxu0 %v864
    %1136 = vmatpush1.bf16.msra.mxu0 %v863
    %1137 = vmatprep.subr.bf16.mxu0 %v867
    %1138 = vmatpush1.bf16.msra.mxu0 %v866
    %1139 = vmatprep.subr.bf16.mxu0 %v870
    %1140 = vmatpush1.bf16.msra.mxu0 %v869
    %1141 = vmatprep.subr.bf16.mxu0 %v873
    %1142 = vmatpush1.bf16.msra.mxu0 %v872
    %1143 = vmatprep.subr.bf16.mxu0 %v876
    %1144 = vmatpush1.bf16.msra.mxu0 %v875
    %1145 = vmatprep.subr.bf16.mxu0 %v879
    %1146 = vmatpush1.bf16.msra.mxu0 %v878
    %1147 = vmatprep.subr.bf16.mxu0 %v882
    %1148 = vmatpush1.bf16.msra.mxu0 %v881
    %1149 = vmatprep.subr.bf16.mxu0 %v885
    %1150 = vmatpush1.bf16.msra.mxu0 %v884
    %1151 = vmatprep.subr.bf16.mxu0 %v888
    %1152 = vmatpush1.bf16.msra.mxu0 %v887
    %1153 = vmatprep.subr.bf16.mxu0 %v891
    %1154 = vmatpush1.bf16.msra.mxu0 %v890
    %1155 = vmatprep.subr.bf16.mxu0 %v894
    %1156 = vmatpush1.bf16.msra.mxu0 %v893
    %1157 = vmatprep.subr.bf16.mxu0 %v897
    %1158 = vmatpush1.bf16.msra.mxu0 %v896
    %1159 = vmatprep.subr.bf16.mxu0 %v900
    %1160 = vmatpush1.bf16.msra.mxu0 %v899
    %1161 = vmatprep.subr.bf16.mxu0 %v903
    %1162 = vmatpush1.bf16.msra.mxu0 %v902
    %1163 = vmatprep.mubr.bf16.mxu0 %v71
    %1164 = vmatmul.mubr.bf16.gmra.mrb[0].mxu0 %v70
    %v1165 = vpop.f32.mrb[0].mxu0
    %v1166 = vadd.f32 %v1125, %v1165
    %v1167 = vpop.f32.mrb[0].mxu0
    %v1168 = vadd.f32 %v1127, %v1167
    %v1169 = vpop.f32.mrb[0].mxu0
    %v1170 = vpop.f32.mrb[0].mxu0
    %1171 = vdwg.mxu0
    %1172 = vmatprep.subr.bf16.mxu0 0
    %1173 = vmatpush1.bf16.msra.mxu0 %v763
    %1174 = vmatprep.subr.bf16.mxu0 0
    %1175 = vmatpush1.bf16.msra.mxu0 %v766
    %1176 = vmatprep.subr.bf16.mxu0 0
    %1177 = vmatpush1.bf16.msra.mxu0 %v769
    %1178 = vmatprep.subr.bf16.mxu0 0
    %1179 = vmatpush1.bf16.msra.mxu0 %v772
    %1180 = vmatprep.subr.bf16.mxu0 0
    %1181 = vmatpush1.bf16.msra.mxu0 %v775
    %1182 = vmatprep.subr.bf16.mxu0 0
    %1183 = vmatpush1.bf16.msra.mxu0 %v778
    %1184 = vmatprep.subr.bf16.mxu0 0
    %1185 = vmatpush1.bf16.msra.mxu0 %v781
    %1186 = vmatprep.subr.bf16.mxu0 0
    %1187 = vmatpush1.bf16.msra.mxu0 %v784
    %1188 = vmatprep.subr.bf16.mxu0 0
    %1189 = vmatpush1.bf16.msra.mxu0 %v787
    %1190 = vmatprep.subr.bf16.mxu0 0
    %1191 = vmatpush1.bf16.msra.mxu0 %v790
    %1192 = vmatprep.subr.bf16.mxu0 0
    %1193 = vmatpush1.bf16.msra.mxu0 %v793
    %1194 = vmatprep.subr.bf16.mxu0 0
    %1195 = vmatpush1.bf16.msra.mxu0 %v796
    %1196 = vmatprep.subr.bf16.mxu0 0
    %1197 = vmatpush1.bf16.msra.mxu0 %v799
    %1198 = vmatprep.subr.bf16.mxu0 0
    %1199 = vmatpush1.bf16.msra.mxu0 %v802
    %1200 = vmatprep.subr.bf16.mxu0 0
    %1201 = vmatpush1.bf16.msra.mxu0 %v805
    %1202 = vmatprep.subr.bf16.mxu0 0
    %1203 = vmatpush1.bf16.msra.mxu0 %v808
    %1204 = vmatprep.mubr.bf16.mxu0 %v67
    %1205 = vmatmul.mubr.bf16.gmra.mrb[0].mxu0 %v66
    %v1206 = vpop.f32.mrb[0].mxu0
    %v1207 = vadd.f32 %v277, %v1206
    %v1208 = vpop.f32.mrb[0].mxu0
    %v1209 = vpop.f32.mrb[0].mxu0
    %v1210 = vpop.f32.mrb[0].mxu0
    %1211 = vdwg.mxu0
    %1212 = vmatprep.subr.bf16.mxu0 0
    %1213 = vmatpush1.bf16.msra.mxu0 %v811
    %1214 = vmatprep.subr.bf16.mxu0 0
    %1215 = vmatpush1.bf16.msra.mxu0 %v814
    %1216 = vmatprep.subr.bf16.mxu0 0
    %1217 = vmatpush1.bf16.msra.mxu0 %v817
    %1218 = vmatprep.subr.bf16.mxu0 0
    %1219 = vmatpush1.bf16.msra.mxu0 %v820
    %1220 = vmatprep.subr.bf16.mxu0 0
    %1221 = vmatpush1.bf16.msra.mxu0 %v823
    %1222 = vmatprep.subr.bf16.mxu0 0
    %1223 = vmatpush1.bf16.msra.mxu0 %v826
    %1224 = vmatprep.subr.bf16.mxu0 0
    %1225 = vmatpush1.bf16.msra.mxu0 %v829
    %1226 = vmatprep.subr.bf16.mxu0 0
    %1227 = vmatpush1.bf16.msra.mxu0 %v832
    %1228 = vmatprep.subr.bf16.mxu0 0
    %1229 = vmatpush1.bf16.msra.mxu0 %v835
    %1230 = vmatprep.subr.bf16.mxu0 0
    %1231 = vmatpush1.bf16.msra.mxu0 %v838
    %1232 = vmatprep.subr.bf16.mxu0 0
    %1233 = vmatpush1.bf16.msra.mxu0 %v841
    %1234 = vmatprep.subr.bf16.mxu0 0
    %1235 = vmatpush1.bf16.msra.mxu0 %v844
    %1236 = vmatprep.subr.bf16.mxu0 0
    %1237 = vmatpush1.bf16.msra.mxu0 %v847
    %1238 = vmatprep.subr.bf16.mxu0 0
    %1239 = vmatpush1.bf16.msra.mxu0 %v850
    %1240 = vmatprep.subr.bf16.mxu0 0
    %1241 = vmatpush1.bf16.msra.mxu0 %v853
    %1242 = vmatprep.subr.bf16.mxu0 0
    %1243 = vmatpush1.bf16.msra.mxu0 %v856
    %1244 = vmatprep.mubr.bf16.mxu0 %v69
    %1245 = vmatmul.mubr.bf16.gmra.mrb[0].mxu0 %v68
    %v1246 = vpop.f32.mrb[0].mxu0
    %v1247 = vadd.f32 %v1207, %v1246
    %v1248 = vpop.f32.mrb[0].mxu0
    %v1249 = vpop.f32.mrb[0].mxu0
    %v1250 = vpop.f32.mrb[0].mxu0
    %1251 = vdwg.mxu0
    %1252 = vmatprep.subr.bf16.mxu0 0
    %1253 = vmatpush1.bf16.msra.mxu0 %v859
    %1254 = vmatprep.subr.bf16.mxu0 0
    %1255 = vmatpush1.bf16.msra.mxu0 %v862
    %1256 = vmatprep.subr.bf16.mxu0 0
    %1257 = vmatpush1.bf16.msra.mxu0 %v865
    %1258 = vmatprep.subr.bf16.mxu0 0
    %1259 = vmatpush1.bf16.msra.mxu0 %v868
    %1260 = vmatprep.subr.bf16.mxu0 0
    %1261 = vmatpush1.bf16.msra.mxu0 %v871
    %1262 = vmatprep.subr.bf16.mxu0 0
    %1263 = vmatpush1.bf16.msra.mxu0 %v874
    %1264 = vmatprep.subr.bf16.mxu0 0
    %1265 = vmatpush1.bf16.msra.mxu0 %v877
    %1266 = vmatprep.subr.bf16.mxu0 0
    %1267 = vmatpush1.bf16.msra.mxu0 %v880
    %1268 = vmatprep.subr.bf16.mxu0 0
    %1269 = vmatpush1.bf16.msra.mxu0 %v883
    %1270 = vmatprep.subr.bf16.mxu0 0
    %1271 = vmatpush1.bf16.msra.mxu0 %v886
    %1272 = vmatprep.subr.bf16.mxu0 0
    %1273 = vmatpush1.bf16.msra.mxu0 %v889
    %1274 = vmatprep.subr.bf16.mxu0 0
    %1275 = vmatpush1.bf16.msra.mxu0 %v892
    %1276 = vmatprep.subr.bf16.mxu0 0
    %1277 = vmatpush1.bf16.msra.mxu0 %v895
    %1278 = vmatprep.subr.bf16.mxu0 0
    %1279 = vmatpush1.bf16.msra.mxu0 %v898
    %1280 = vmatprep.subr.bf16.mxu0 0
    %1281 = vmatpush1.bf16.msra.mxu0 %v901
    %1282 = vmatprep.subr.bf16.mxu0 0
    %1283 = vmatpush1.bf16.msra.mxu0 %v904
    %1284 = vmatprep.mubr.bf16.mxu0 %v71
    %1285 = vmatmul.mubr.bf16.gmra.mrb[0].mxu0 %v70
    %v1286 = vpop.f32.mrb[0].mxu0
    %v1287 = vadd.f32 %v1247, %v1286
    %v1288 = vpop.f32.mrb[0].mxu0
    %v1289 = vpop.f32.mrb[0].mxu0
    %v1290 = vpop.f32.mrb[0].mxu0
    %1291 = vdwg.mxu0
    %v1292 = vmax.f32 %v1166, 0.0
    %v1293 = vmax.f32 %v1168, 0.0
    %v1294 = vmax.f32 %v1287, 0.0
    %v1295 = vpack.c.bf16 %v1292, %v1292
    %v1296 = vpack.c.bf16 %v1293, %v1293
    %v1297 = vpack.c.bf16 %v1294, %v1294
    %v1298 = vld [vmem:[#allocation6] sm:$0xf]
    %v1299 = vld [vmem:[#allocation6 + $0x4] sm:$0xf]
    %v1300 = vld [vmem:[#allocation6 + $0x8] sm:$0xf]
    %v1301 = vld [vmem:[#allocation6 + $0xc] sm:$0xf]
    %v1302 = vld [vmem:[#allocation6 + $0x10] sm:$0xf]
    %v1303 = vld [vmem:[#allocation6 + $0x14] sm:$0xf]
    %v1304 = vld [vmem:[#allocation6 + $0x18] sm:$0xf]
    %v1305 = vld [vmem:[#allocation6 + $0x1c] sm:$0xf]
    %v1306 = vld [vmem:[#allocation6 + $0x20] sm:$0xf]
    %v1307 = vld [vmem:[#allocation6 + $0x24] sm:$0xf]
    %v1308 = vld [vmem:[#allocation6 + $0x28] sm:$0xf]
    %v1309 = vld [vmem:[#allocation6 + $0x2c] sm:$0xf]
    %v1310 = vld [vmem:[#allocation6 + $0x30] sm:$0xf]
    %v1311 = vld [vmem:[#allocation6 + $0x34] sm:$0xf]
    %v1312 = vld [vmem:[#allocation6 + $0x38] sm:$0xf]
    %v1313 = vld [vmem:[#allocation6 + $0x3c] sm:$0xf]
    %v1314 = vld [vmem:[#allocation6 + $0x40] sm:$0xf]
    %v1315 = vld [vmem:[#allocation6 + $0x44] sm:$0xf]
    %v1316 = vld [vmem:[#allocation6 + $0x48] sm:$0xf]
    %v1317 = vld [vmem:[#allocation6 + $0x4c] sm:$0xf]
    %v1318 = vld [vmem:[#allocation6 + $0x50] sm:$0xf]
    %v1319 = vld [vmem:[#allocation6 + $0x54] sm:$0xf]
    %v1320 = vld [vmem:[#allocation6 + $0x58] sm:$0xf]
    %v1321 = vld [vmem:[#allocation6 + $0x5c] sm:$0xf]
    %v1322 = vld [vmem:[#allocation6 + $0x60] sm:$0xf]
    %v1323 = vld [vmem:[#allocation6 + $0x64] sm:$0xf]
    %v1324 = vld [vmem:[#allocation6 + $0x68] sm:$0xf]
    %v1325 = vld [vmem:[#allocation6 + $0x6c] sm:$0xf]
    %v1326 = vld [vmem:[#allocation6 + $0x70] sm:$0xf]
    %v1327 = vld [vmem:[#allocation6 + $0x74] sm:$0xf]
    %v1328 = vld [vmem:[#allocation6 + $0x78] sm:$0xf]
    %v1329 = vld [vmem:[#allocation6 + $0x7c] sm:$0xf]
    %v1330 = vld [vmem:[#allocation6 + $0x80] sm:$0xf]
    %v1331 = vld [vmem:[#allocation6 + $0x84] sm:$0xf]
    %v1332 = vld [vmem:[#allocation6 + $0x88] sm:$0xf]
    %v1333 = vld [vmem:[#allocation6 + $0x8c] sm:$0xf]
    %v1334 = vld [vmem:[#allocation6 + $0x90] sm:$0xf]
    %v1335 = vld [vmem:[#allocation6 + $0x94] sm:$0xf]
    %v1336 = vld [vmem:[#allocation6 + $0x98] sm:$0xf]
    %v1337 = vld [vmem:[#allocation6 + $0x9c] sm:$0xf]
    %v1338 = vld [vmem:[#allocation6 + $0xa0] sm:$0xf]
    %v1339 = vld [vmem:[#allocation6 + $0xa4] sm:$0xf]
    %v1340 = vld [vmem:[#allocation6 + $0xa8] sm:$0xf]
    %v1341 = vld [vmem:[#allocation6 + $0xac] sm:$0xf]
    %v1342 = vld [vmem:[#allocation6 + $0xb0] sm:$0xf]
    %v1343 = vld [vmem:[#allocation6 + $0xb4] sm:$0xf]
    %v1344 = vld [vmem:[#allocation6 + $0xb8] sm:$0xf]
    %v1345 = vld [vmem:[#allocation6 + $0xbc] sm:$0xf]
    %v1346 = vld [vmem:[%s4] sm:$0x1]
    %v1348 = vlaneseq
    %v1349 = vshrl.u32 %v1348, 7
    %v1350 = vsub.s32 0, %v1349
    %v1351 = vrot.slane %v1346, %v1350
    %v1401 = vunpack.c.l.b16 %v1298
    %v1402 = vunpack.c.l.b16 %v1299
    %v1403 = vunpack.c.l.b16 %v1300
    %v1404 = vunpack.c.l.b16 %v1301
    %v1405 = vunpack.c.l.b16 %v1302
    %v1406 = vunpack.c.l.b16 %v1303
    %v1407 = vunpack.c.l.b16 %v1304
    %v1408 = vunpack.c.l.b16 %v1305
    %v1409 = vunpack.c.l.b16 %v1306
    %v1410 = vunpack.c.l.b16 %v1307
    %v1411 = vunpack.c.l.b16 %v1308
    %v1412 = vunpack.c.l.b16 %v1309
    %v1413 = vunpack.c.l.b16 %v1310
    %v1414 = vunpack.c.l.b16 %v1311
    %v1415 = vunpack.c.l.b16 %v1312
    %v1416 = vunpack.c.l.b16 %v1313
    %v1417 = vunpack.c.l.b16 %v1314
    %v1418 = vunpack.c.l.b16 %v1315
    %v1419 = vunpack.c.l.b16 %v1316
    %v1420 = vunpack.c.l.b16 %v1317
    %v1421 = vunpack.c.l.b16 %v1318
    %v1422 = vunpack.c.l.b16 %v1319
    %v1423 = vunpack.c.l.b16 %v1320
    %v1424 = vunpack.c.l.b16 %v1321
    %v1425 = vunpack.c.l.b16 %v1322
    %v1426 = vunpack.c.l.b16 %v1323
    %v1427 = vunpack.c.l.b16 %v1324
    %v1428 = vunpack.c.l.b16 %v1325
    %v1429 = vunpack.c.l.b16 %v1326
    %v1430 = vunpack.c.l.b16 %v1327
    %v1431 = vunpack.c.l.b16 %v1328
    %v1432 = vunpack.c.l.b16 %v1329
    %v1433 = vunpack.c.l.b16 %v1330
    %v1434 = vunpack.c.l.b16 %v1331
    %v1435 = vunpack.c.l.b16 %v1332
    %v1436 = vunpack.c.l.b16 %v1333
    %v1437 = vunpack.c.l.b16 %v1334
    %v1438 = vunpack.c.l.b16 %v1335
    %v1439 = vunpack.c.l.b16 %v1336
    %v1440 = vunpack.c.l.b16 %v1337
    %v1441 = vunpack.c.l.b16 %v1338
    %v1442 = vunpack.c.l.b16 %v1339
    %v1443 = vunpack.c.l.b16 %v1340
    %v1444 = vunpack.c.l.b16 %v1341
    %v1445 = vunpack.c.l.b16 %v1342
    %v1446 = vunpack.c.l.b16 %v1343
    %v1447 = vunpack.c.l.b16 %v1344
    %v1448 = vunpack.c.l.b16 %v1345
    %v1449 = vpack.c.b16 %v1402, %v1401
    %v1450 = vpack.c.b16 %v1404, %v1403
    %v1451 = vpack.c.b16 %v1406, %v1405
    %v1452 = vpack.c.b16 %v1408, %v1407
    %v1453 = vpack.c.b16 %v1410, %v1409
    %v1454 = vpack.c.b16 %v1412, %v1411
    %v1455 = vpack.c.b16 %v1414, %v1413
    %v1456 = vpack.c.b16 %v1416, %v1415
    %v1457 = vpack.c.b16 %v1418, %v1417
    %v1458 = vpack.c.b16 %v1420, %v1419
    %v1459 = vpack.c.b16 %v1422, %v1421
    %v1460 = vpack.c.b16 %v1424, %v1423
    %v1461 = vpack.c.b16 %v1426, %v1425
    %v1462 = vpack.c.b16 %v1428, %v1427
    %v1463 = vpack.c.b16 %v1430, %v1429
    %v1464 = vpack.c.b16 %v1432, %v1431
    %v1465 = vpack.c.b16 %v1434, %v1433
    %v1466 = vpack.c.b16 %v1436, %v1435
    %v1467 = vpack.c.b16 %v1438, %v1437
    %v1468 = vpack.c.b16 %v1440, %v1439
    %v1469 = vpack.c.b16 %v1442, %v1441
    %v1470 = vpack.c.b16 %v1444, %v1443
    %v1471 = vpack.c.b16 %v1446, %v1445
    %v1472 = vpack.c.b16 %v1448, %v1447
    %1497 = vmatprep.subr.bf16.mxu0 0
    %1498 = vmatpush1.bf16.msra.mxu0 %v1449
    %1499 = vmatprep.subr.bf16.mxu0 0
    %1500 = vmatpush1.bf16.msra.mxu0 %v1450
    %1501 = vmatprep.subr.bf16.mxu0 0
    %1502 = vmatpush1.bf16.msra.mxu0 %v1451
    %1503 = vmatprep.subr.bf16.mxu0 0
    %1504 = vmatpush1.bf16.msra.mxu0 %v1452
    %1505 = vmatprep.subr.bf16.mxu0 0
    %1506 = vmatpush1.bf16.msra.mxu0 %v1453
    %1507 = vmatprep.subr.bf16.mxu0 0
    %1508 = vmatpush1.bf16.msra.mxu0 %v1454
    %1509 = vmatprep.subr.bf16.mxu0 0
    %1510 = vmatpush1.bf16.msra.mxu0 %v1455
    %1511 = vmatprep.subr.bf16.mxu0 0
    %1512 = vmatpush1.bf16.msra.mxu0 %v1456
    %1513 = vmatprep.subr.bf16.mxu0 0
    %1514 = vmatpush1.bf16.msra.mxu0 %v1457
    %1515 = vmatprep.subr.bf16.mxu0 0
    %1516 = vmatpush1.bf16.msra.mxu0 %v1458
    %1517 = vmatprep.subr.bf16.mxu0 0
    %1518 = vmatpush1.bf16.msra.mxu0 %v1459
    %1519 = vmatprep.subr.bf16.mxu0 0
    %1520 = vmatpush1.bf16.msra.mxu0 %v1460
    %1521 = vmatprep.subr.bf16.mxu0 0
    %1522 = vmatpush1.bf16.msra.mxu0 %v1461
    %1523 = vmatprep.subr.bf16.mxu0 0
    %1524 = vmatpush1.bf16.msra.mxu0 %v1462
    %1525 = vmatprep.subr.bf16.mxu0 0
    %1526 = vmatpush1.bf16.msra.mxu0 %v1463
    %1527 = vmatprep.subr.bf16.mxu0 0
    %1528 = vmatpush1.bf16.msra.mxu0 %v1464
    %1529 = vmatprep.mubr.bf16.mxu0 %v1296
    %1530 = vmatmul.mubr.bf16.gmra.mrb[0].mxu0 %v1295
    %v1531 = vpop.f32.mrb[0].mxu0
    %v1532 = vadd.f32 %v1351, %v1531
    %v1533 = vpop.f32.mrb[0].mxu0
    %v1534 = vpop.f32.mrb[0].mxu0
    %v1535 = vpop.f32.mrb[0].mxu0
    %1536 = vdwg.mxu0
    %1537 = vmatprep.subr.bf16.mxu0 0
    %1538 = vmatpush1.bf16.msra.mxu0 %v1465
    %1539 = vmatprep.subr.bf16.mxu0 0
    %1540 = vmatpush1.bf16.msra.mxu0 %v1466
    %1541 = vmatprep.subr.bf16.mxu0 0
    %1542 = vmatpush1.bf16.msra.mxu0 %v1467
    %1543 = vmatprep.subr.bf16.mxu0 0
    %1544 = vmatpush1.bf16.msra.mxu0 %v1468
    %1545 = vmatprep.subr.bf16.mxu0 0
    %1546 = vmatpush1.bf16.msra.mxu0 %v1469
    %1547 = vmatprep.subr.bf16.mxu0 0
    %1548 = vmatpush1.bf16.msra.mxu0 %v1470
    %1549 = vmatprep.subr.bf16.mxu0 0
    %1550 = vmatpush1.bf16.msra.mxu0 %v1471
    %1551 = vmatprep.subr.bf16.mxu0 0
    %1552 = vmatpush1.bf16.msra.mxu0 %v1472
    %1553 = vmatprep.subr.bf16.mxu0 0
    %1554 = vmatpush1.bf16.msra.mxu0 0
    %1555 = vmatprep.subr.bf16.mxu0 0
    %1556 = vmatpush1.bf16.msra.mxu0 0
    %1557 = vmatprep.subr.bf16.mxu0 0
    %1558 = vmatpush1.bf16.msra.mxu0 0
    %1559 = vmatprep.subr.bf16.mxu0 0
    %1560 = vmatpush1.bf16.msra.mxu0 0
    %1561 = vmatprep.subr.bf16.mxu0 0
    %1562 = vmatpush1.bf16.msra.mxu0 0
    %1563 = vmatprep.subr.bf16.mxu0 0
    %1564 = vmatpush1.bf16.msra.mxu0 0
    %1565 = vmatprep.subr.bf16.mxu0 0
    %1566 = vmatpush1.bf16.msra.mxu0 0
    %1567 = vmatprep.subr.bf16.mxu0 0
    %1568 = vmatpush1.bf16.msra.mxu0 0
    %1569 = vmatprep.mubr.bf16.mxu0 0
    %1570 = vmatmul.mubr.bf16.gmra.mrb[0].mxu0 %v1297
    %v1571 = vpop.f32.mrb[0].mxu0
    %v1572 = vadd.f32 %v1532, %v1571
    %v1573 = vpop.f32.mrb[0].mxu0
    %v1574 = vpop.f32.mrb[0].mxu0
    %v1575 = vpop.f32.mrb[0].mxu0
    %1576 = vdwg.mxu0
    %vm1577 = vcmask 15360
    %1578 = vst.msk [vmem:[%s5] sm:$0xff] %vm1577, %v1572
    // Predicated region
    $region34: #{tpu_custom_call.1} parent=1 // pred_check
      _
    $region35: #{tpu_custom_call.1} parent=1 // pred_check_branch
      %1580 = sbr.rel (0) target = $region37
    $region36: #{tpu_custom_call.1} parent=1 // pred_region
      _
    $region37: #{tpu_custom_call.1} parent=1 // pred_fallthru
      _
    // Predicated region
    $region38: #{tpu_custom_call.1} parent=1 // pred_check
      _
    $region39: #{tpu_custom_call.1} parent=1 // pred_check_branch
      %1582 = sbr.rel (0) target = $region41
    $region40: #{tpu_custom_call.1} parent=1 // pred_region
      _
    $region41: #{tpu_custom_call.1} parent=1 // pred_fallthru
      _
    %1583 = vsyncpa [#allocation3], 1
    %1584 = vsyncpa [#allocation5], 1

</llo_original>
